<compile_context>
chip_gen: v7x
topology: tpu7x:2x2x1
jax: 0.10.0
libtpu: 0.0.40
codegen_flags: <defaults>
</compile_context>

<pallas_src>
import functools

import numpy as np
import jax
import jax.numpy as jnp
from jax.experimental import pallas as pl
from jax.experimental.pallas import tpu as pltpu


def _round_up(x, m):
    return (x + m - 1) // m * m


def _spatial_softmax_kernel(feat_ref, pos_ref, out_ref):
    # feat_ref: (TM, S_pad)  input dtype (f32 / bf16 ...)
    # pos_ref:  (2,  S_pad)  f32  (row 0 = pos_x, row 1 = pos_y, pad cols = 0)
    # out_ref:  (TM, 2)      f32  (col 0 = expected_x, col 1 = expected_y)
    f = feat_ref[...].astype(jnp.float32)                    # (TM, S_pad)

    # numerically stable softmax numerator; padded columns hold -inf -> exp 0
    m = jnp.max(f, axis=-1, keepdims=True)                   # (TM, 1)
    e = jnp.exp(f - m)                                       # (TM, S_pad)

    denom = jnp.sum(e, axis=-1, keepdims=True)               # (TM, 1)
    xnum = jnp.sum(pos_ref[0:1, :] * e, axis=-1, keepdims=True)
    ynum = jnp.sum(pos_ref[1:2, :] * e, axis=-1, keepdims=True)

    inv = pl.reciprocal(denom)                               # exact; only TM values
    out_ref[:, 0:1] = (xnum * inv).astype(out_ref.dtype)
    out_ref[:, 1:2] = (ynum * inv).astype(out_ref.dtype)


def _make_pos(height, width, s_pad):
    """Reproduce the module's np.meshgrid construction exactly; pack + pad."""
    pos_x, pos_y = np.meshgrid(
        np.linspace(-1.0, 1.0, height), np.linspace(-1.0, 1.0, width)
    )
    pos = np.stack(
        [pos_x.reshape(-1), pos_y.reshape(-1)], axis=0
    ).astype(np.float32)                                     # (2, H*W)
    if s_pad != pos.shape[1]:
        # zero pos in padded columns: they contribute nothing to the sums
        pos = np.pad(pos, ((0, 0), (0, s_pad - pos.shape[1])))
    return jnp.asarray(pos)


def _choose_block_rows(n_rows, s_pad, itemsize, max_rows=1024):
    # Keep one input tile <= ~4 MiB so the double-buffered pipeline stays well
    # under the default scoped VMEM on every TPU generation (16 MiB on v5e,
    # 32 MiB on v6e/v7x; 64 MiB physical on v7x).
    budget = 4 * 1024 * 1024
    tm = budget // max(1, s_pad * itemsize)
    tm = (tm // 8) * 8
    tm = max(8, min(tm, max_rows, _round_up(n_rows, 8)))
    return int(tm)


@functools.partial(jax.jit, static_argnames=("height", "width", "block_rows"))
def spatial_softmax(feature, *, height, width, block_rows=None):
    """feature: (B, C, H, W) -> (B, C, 2) float32 (need_prob=False path)."""
    B, C, H, W = feature.shape
    assert (H, W) == (height, width)
    S = H * W
    N = B * C
    S_pad = _round_up(S, 128)

    flat = feature.reshape(N, S)          # no dtype cast here (bf16 stays bf16)
    if S_pad != S:
        flat = jnp.pad(
            flat, ((0, 0), (0, S_pad - S)), constant_values=-jnp.inf
        )

    pos = _make_pos(height, width, S_pad)                    # (2, S_pad) f32

    itemsize = jnp.dtype(flat.dtype).itemsize
    tm = (
        int(block_rows)
        if block_rows is not None
        else _choose_block_rows(N, S_pad, itemsize)
    )
    assert tm % 8 == 0
    grid = (pl.cdiv(N, tm),)

    out = pl.pallas_call(
        _spatial_softmax_kernel,
        out_shape=jax.ShapeDtypeStruct((N, 2), jnp.float32),
        grid_spec=pltpu.PrefetchScalarGridSpec(
            num_scalar_prefetch=0,
            grid=grid,
            in_specs=[
                pl.BlockSpec((tm, S_pad), lambda i: (i, 0)),
                pl.BlockSpec((2, S_pad), lambda i: (0, 0)),   # constant block
            ],
            out_specs=pl.BlockSpec((tm, 2), lambda i: (i, 0)),
        ),
        compiler_params=pltpu.CompilerParams(
            dimension_semantics=("parallel",),
        ),
    )(flat, pos)

    return out.reshape(B, C, 2)


def _reference(feature, height, width):
    """Pure-JAX reference matching the PyTorch forward (need_prob=False)."""
    B, C, H, W = feature.shape
    pos_x, pos_y = np.meshgrid(
        np.linspace(-1.0, 1.0, height), np.linspace(-1.0, 1.0, width)
    )
    pos_x = jnp.asarray(pos_x.reshape(-1).astype(np.float32))
    pos_y = jnp.asarray(pos_y.reshape(-1).astype(np.float32))
    flat = feature.reshape(B, C, H * W).astype(jnp.float32)
    sm = jax.nn.softmax(flat, axis=-1)
    ex = jnp.sum(pos_x * sm, axis=-1)
    ey = jnp.sum(pos_y * sm, axis=-1)
    return jnp.stack([ex, ey], axis=2)


if __name__ == "__main__":
    key = jax.random.PRNGKey(0)

    # 1) Primary small-shape test (f32, S already a multiple of 128).
    B, C, H, W = 2, 4, 16, 16
    k1, k2 = jax.random.split(key)
    feature = jax.random.normal(k1, (B, C, H, W), dtype=jnp.float32)
    out = jax.block_until_ready(spatial_softmax(feature, height=H, width=W))
    ref = _reference(feature, H, W)
    np.testing.assert_allclose(np.asarray(out), np.asarray(ref), rtol=1e-5, atol=1e-5)
    assert out.shape == (B, C, 2)

    # 2) Multi-tile grid + ragged spatial size (S=49 padded to 128, 2 grid steps).
    B2, C2, H2, W2 = 2, 6, 7, 7
    feature2 = jax.random.normal(k2, (B2, C2, H2, W2), dtype=jnp.float32)
    out2 = jax.block_until_ready(
        spatial_softmax(feature2, height=H2, width=W2, block_rows=8)
    )
    ref2 = _reference(feature2, H2, W2)
    np.testing.assert_allclose(np.asarray(out2), np.asarray(ref2), rtol=1e-5, atol=1e-5)

    # 3) bf16 feature path (halved HBM read bytes; upcast happens in-kernel).
    feature_bf16 = feature.astype(jnp.bfloat16)
    out3 = jax.block_until_ready(spatial_softmax(feature_bf16, height=H, width=W))
    ref3 = _reference(feature_bf16.astype(jnp.float32), H, W)
    np.testing.assert_allclose(np.asarray(out3), np.asarray(ref3), rtol=1e-4, atol=1e-4)

    print("KERNEL_OK")
</pallas_src>

<mosaic_0001>
module attributes {stable_mosaic.version = 11 : i64} {
  func.func @_spatial_softmax_kernel(%arg0: i32, %arg1: memref<8x256xf32, #tpu.memory_space<vmem>>, %arg2: memref<2x256xf32, #tpu.memory_space<vmem>>, %arg3: memref<8x2xf32, #tpu.memory_space<vmem>>) attributes {dimension_semantics = [#tpu.dimension_semantics<parallel>], iteration_bounds = array<i64: 1>, scalar_prefetch = 0 : i64, scratch_operands = 0 : i64, tpu.core_type = #tpu.core_type<tc>, window_params = [{transform_indices = @transform_0, window_bounds = array<i64: 8, 256>}, {pipeline_mode = #tpu.pipeline_mode<synchronous>, transform_indices = @transform_1, window_bounds = array<i64: 2, 256>}, {transform_indices = @transform_2, window_bounds = array<i64: 8, 2>}]} {
    %c0 = arith.constant 0 : index
    %c0_0 = arith.constant 0 : index
    %0 = vector.load %arg1[%c0, %c0_0] : memref<8x256xf32, #tpu.memory_space<vmem>>, vector<8x256xf32>
    %cst = arith.constant dense<0xFF800000> : vector<8xf32>
    %1 = vector.multi_reduction <maximumf>, %0, %cst [1] : vector<8x256xf32> to vector<8xf32>
    %2 = vector.shape_cast %1 : vector<8xf32> to vector<8x1xf32>
    %3 = vector.broadcast %2 : vector<8x1xf32> to vector<8x256xf32>
    %4 = arith.subf %0, %3 : vector<8x256xf32>
    %5 = math.exp %4 : vector<8x256xf32>
    %cst_1 = arith.constant dense<0.000000e+00> : vector<8xf32>
    %6 = vector.multi_reduction <add>, %5, %cst_1 [1] : vector<8x256xf32> to vector<8xf32>
    %7 = vector.shape_cast %6 : vector<8xf32> to vector<8x1xf32>
    %c0_2 = arith.constant 0 : index
    %c0_3 = arith.constant 0 : index
    %8 = vector.load %arg2[%c0_2, %c0_3] : memref<2x256xf32, #tpu.memory_space<vmem>>, vector<1x256xf32>
    %9 = vector.broadcast %8 : vector<1x256xf32> to vector<8x256xf32>
    %10 = arith.mulf %9, %5 : vector<8x256xf32>
    %cst_4 = arith.constant dense<0.000000e+00> : vector<8xf32>
    %11 = vector.multi_reduction <add>, %10, %cst_4 [1] : vector<8x256xf32> to vector<8xf32>
    %12 = vector.shape_cast %11 : vector<8xf32> to vector<8x1xf32>
    %c1 = arith.constant 1 : index
    %c0_5 = arith.constant 0 : index
    %13 = vector.load %arg2[%c1, %c0_5] : memref<2x256xf32, #tpu.memory_space<vmem>>, vector<1x256xf32>
    %14 = vector.broadcast %13 : vector<1x256xf32> to vector<8x256xf32>
    %15 = arith.mulf %14, %5 : vector<8x256xf32>
    %cst_6 = arith.constant dense<0.000000e+00> : vector<8xf32>
    %16 = vector.multi_reduction <add>, %15, %cst_6 [1] : vector<8x256xf32> to vector<8xf32>
    %17 = vector.shape_cast %16 : vector<8xf32> to vector<8x1xf32>
    %18 = tpu.reciprocal %7 : vector<8x1xf32> -> vector<8x1xf32>
    %19 = arith.mulf %12, %18 : vector<8x1xf32>
    %c0_7 = arith.constant 0 : index
    %c0_8 = arith.constant 0 : index
    %20 = vector.load %arg3[%c0_7, %c0_8] : memref<8x2xf32, #tpu.memory_space<vmem>>, vector<8x1xf32>
    tpu.vector_store %arg3[%c0_7, %c0_8], %19 {strides = array<i32>} : memref<8x2xf32, #tpu.memory_space<vmem>>, vector<8x1xf32>,
    %21 = arith.mulf %17, %18 : vector<8x1xf32>
    %c0_9 = arith.constant 0 : index
    %c1_10 = arith.constant 1 : index
    %22 = vector.load %arg3[%c0_9, %c1_10] : memref<8x2xf32, #tpu.memory_space<vmem>>, vector<8x1xf32>
    tpu.vector_store %arg3[%c0_9, %c1_10], %21 {strides = array<i32>} : memref<8x2xf32, #tpu.memory_space<vmem>>, vector<8x1xf32>,
    return
  }
  func.func @transform_0(%arg0: i32) -> (i32, i32) {
    %c0_i32 = arith.constant 0 : i32
    %c0_i32_0 = arith.constant 0 : i32
    return %arg0, %c0_i32 : i32, i32
  }
  func.func @transform_1(%arg0: i32) -> (i32, i32) {
    %c0_i32 = arith.constant 0 : i32
    %c0_i32_0 = arith.constant 0 : i32
    %c0_i32_1 = arith.constant 0 : i32
    return %c0_i32, %c0_i32_0 : i32, i32
  }
  func.func @transform_2(%arg0: i32) -> (i32, i32) {
    %c0_i32 = arith.constant 0 : i32
    %c0_i32_0 = arith.constant 0 : i32
    return %arg0, %c0_i32 : i32, i32
  }
}

</mosaic_0001>

<llo_original>
// kernel: spatial_softmax.1
$region0: #{spatial_softmax.1}
  #allocation0 [shape = 'u32[]', space=smem, size = 0x4, offset = 0x4, fixed_abs, tag = 'smem constant byte address 0x4 - core index']
  #allocation1 [shape = 'u32[144,128]{1,0:T(1,128)}', space=vmem, size = 0x12000, scoped, tag = 'internal scratch']
  %s0 = inlined_call_operand.vmem [shape: f32[8,256], index: 0, kind: input, shape index: {}]
  %s1 = inlined_call_operand.vmem [shape: f32[2,256], index: 1, kind: input, shape index: {}]
  %s2 = inlined_call_operand.vmem [shape: f32[8,2], index: 2, kind: output, shape index: {}]
  %s3 = sld [smem:[#allocation0]]
  $region18: #{spatial_softmax.1} parent=0
    _
  %s5 = ssub.s32 1, %s3
  %s6 = scalar_select 0, %s5, %s3
  // Predicated region
  $region2: #{spatial_softmax.1} parent=0 // pred_check
    _
  $region3: #{spatial_softmax.1} parent=0 // pred_check_branch
    %8 = sbr.rel (0) target = $region5
  $region4: #{spatial_softmax.1} parent=0 // pred_region
    _
  $region5: #{spatial_softmax.1} parent=0 // pred_fallthru
    _
  // Predicated region
  $region6: #{spatial_softmax.1} parent=0 // pred_check
    _
  $region7: #{spatial_softmax.1} parent=0 // pred_check_branch
    %10 = sbr.rel (0) target = $region9
  $region8: #{spatial_softmax.1} parent=0 // pred_region
    _
  $region9: #{spatial_softmax.1} parent=0 // pred_fallthru
    _
  %v11 = vld [vmem:[%s0] sm:$0xff]
  %v12 = vld [vmem:[%s0 + $0x8] sm:$0xff]
  %v13 = vmax.f32 %v11, %v12
  %14 = vmax.xlane.f32.xlu0 %v13
  %v15 = vpop.xlane.xlu0 %14
  %v16 = vsub.f32 %v11, %v15
  %v17 = vsub.f32 %v12, %v15
  %v18 = vmul.f32 %v16, 1.442695
  %v19 = vpow.pop %v18
  %v20 = vmul.f32 %v17, 1.442695
  %v21 = vpow.pop %v20
  %v22 = vadd.f32 %v19, %v21
  %23 = vadd.xlane.f32.xlu0 %v22
  %v24 = vpop.xlane.xlu0 %23
  %v25 = vld [vmem:[%s1] ss:$2 sm:$0x3]
  %v27 = vlaneseq
  %v28 = vshrl.u32 %v27, 7
  %v29 = vsub.s32 0, %v28
  %v30 = vrot.slane %v25, %v29
  %v31 = vlaneseq
  %v32 = vshrl.u32 %v31, 7
  %v33 = vsub.s32 1, %v32
  %v34 = vrot.slane %v25, %v33
  %v37 = vmul.f32 %v30, %v19
  %v38 = vmul.f32 %v34, %v21
  %v39 = vadd.f32 %v37, %v38
  %40 = vadd.xlane.f32.xlu0 %v39
  %v41 = vpop.xlane.xlu0 %40
  %s42 = scalar_lea.vmem %s1, 1
  %v43 = vld [vmem:[%s42] ss:$2 sm:$0x3]
  %v45 = vlaneseq
  %v46 = vshrl.u32 %v45, 7
  %v47 = vsub.s32 0, %v46
  %v48 = vrot.slane %v43, %v47
  %v49 = vlaneseq
  %v50 = vshrl.u32 %v49, 7
  %v51 = vsub.s32 1, %v50
  %v52 = vrot.slane %v43, %v51
  %v55 = vmul.f32 %v48, %v19
  %v56 = vmul.f32 %v52, %v21
  %v57 = vadd.f32 %v55, %v56
  %58 = vadd.xlane.f32.xlu0 %v57
  %v59 = vpop.xlane.xlu0 %58
  %v60 = vrcp.pop %v24
  %v61 = vmul.f32 %v41, %v60
  %vm62 = vcmask 7168
  %63 = vst.msk [vmem:[%s2] sm:$0xff] %vm62, %v61
  %v64 = vmul.f32 %v59, %v60
  %vm65 = vcmask 15368
  %66 = vst.msk [vmem:[%s2] sm:$0xff] %vm65, %v64
  // Predicated region
  $region10: #{spatial_softmax.1} parent=0 // pred_check
    _
  $region11: #{spatial_softmax.1} parent=0 // pred_check_branch
    %68 = sbr.rel (0) target = $region13
  $region12: #{spatial_softmax.1} parent=0 // pred_region
    _
  $region13: #{spatial_softmax.1} parent=0 // pred_fallthru
    _
  // Predicated region
  $region14: #{spatial_softmax.1} parent=0 // pred_check
    _
  $region15: #{spatial_softmax.1} parent=0 // pred_check_branch
    %70 = sbr.rel (0) target = $region17
  $region16: #{spatial_softmax.1} parent=0 // pred_region
    _
  $region17: #{spatial_softmax.1} parent=0 // pred_fallthru
    _

</llo_original>
